<compile_context>
chip_gen: v7x
topology: tpu7x:2x2x1
jax: 0.10.0
libtpu: 0.0.40
codegen_flags: <defaults>
</compile_context>

<pallas_src>
import functools

import jax
import jax.numpy as jnp
import numpy as np
from jax.experimental import pallas as pl
from jax.experimental.pallas import tpu as pltpu


def _cascaded_mlp_kernel(xT_ref, uT_ref, w1x_ref, w1u_ref, b1_ref, w2_ref, b2_ref,
                         out_ref):
    # Layer 1 with the concat fused away:  h^T = W1x @ x^T + W1u @ u^T + b1
    # shapes: (H,2)@(2,bb) + (H,1)@(1,bb) + (H,1)  -> (H, bb), H=2*n_feat (=128)
    h = (jnp.dot(w1x_ref[...], xT_ref[...], preferred_element_type=jnp.float32)
         + jnp.dot(w1u_ref[...], uT_ref[...], preferred_element_type=jnp.float32)
         + b1_ref[...])
    h = jnp.maximum(h, 0.0)  # ReLU (VPU)

    # Layer 2 (block-diagonal packed; scale_dx already folded into w2/b2):
    # (2,H)@(H,bb) + (2,1) -> (2, bb); batch on lanes => lane-dense output store.
    dxT = jnp.dot(w2_ref[...], h, preferred_element_type=jnp.float32) + b2_ref[...]
    out_ref[...] = dxT.astype(out_ref.dtype)


def pack_params(w11, b11, w21, b21, w12, b12, w22, b22, *, scale_dx=1.0):
    """Pack the two PyTorch-layout sub-networks into one batch-minor MLP.

    PyTorch layouts (weight = (out_features, in_features)):
      net_dx1: w11 (F,2) over (x1,u),   b11 (F,),  w21 (1,F),  b21 (1,)
      net_dx2: w12 (F,3) over (x1,x2,u), b12 (F,), w22 (1,F),  b22 (1,)
    Returns (w1x (H,2), w1u (H,1), b1 (H,1), w2 (2,H), b2 (2,1)) with H = 2F.
    """
    F = w11.shape[0]
    H = 2 * F
    dt = w11.dtype
    # net_dx1 only sees x1 -> its x2 column is identically zero (exact).
    w1x_top = jnp.concatenate([w11[:, 0:1], jnp.zeros((F, 1), dt)], axis=1)  # (F,2)
    w1x = jnp.concatenate([w1x_top, w12[:, 0:2]], axis=0)                    # (H,2)
    w1u = jnp.concatenate([w11[:, 1:2], w12[:, 2:3]], axis=0)                # (H,1)
    b1 = jnp.concatenate([b11, b12]).reshape(H, 1)                           # (H,1)
    # Block-diagonal second layer; scale_dx folded in (exact rescale of params).
    w2_row0 = jnp.concatenate([w21, jnp.zeros((1, F), dt)], axis=1)          # (1,H)
    w2_row1 = jnp.concatenate([jnp.zeros((1, F), dt), w22], axis=1)          # (1,H)
    w2 = jnp.concatenate([w2_row0, w2_row1], axis=0) * scale_dx              # (2,H)
    b2 = jnp.concatenate([b21, b22]).reshape(2, 1) * scale_dx                # (2,1)
    return w1x, w1u, b1, w2, b2


def cascaded_tanks_forward(in_x, in_u, w1x, w1u, b1, w2, b2, *, block_b=1024):
    """in_x: (B, 2), in_u: (B, 1)  ->  dx: (B, 2).  Matches the PyTorch forward."""
    B = in_x.shape[0]
    H = w1x.shape[0]

    # Batch-minor layout: features on sublanes, batch on the 128-lane axis
    # (wrapper-side transpose of tiny (B,2)/(B,1) arrays is pure layout plumbing).
    xT = in_x.T  # (2, B)
    uT = in_u.T  # (1, B)

    if B <= block_b:
        bb, Bp = B, B                    # single grid step; full-array block
    else:
        bb = block_b                     # lane tile: must be a multiple of 128
        Bp = pl.cdiv(B, bb) * bb
        if Bp != B:                      # pad batch (lanes) to the tile boundary
            xT = jnp.pad(xT, ((0, 0), (0, Bp - B)))
            uT = jnp.pad(uT, ((0, 0), (0, Bp - B)))
    nb = Bp // bb

    outT = pl.pallas_call(
        _cascaded_mlp_kernel,
        out_shape=jax.ShapeDtypeStruct((2, Bp), in_x.dtype),
        grid_spec=pltpu.PrefetchScalarGridSpec(
            num_scalar_prefetch=0,
            grid=(nb,),
            in_specs=[
                pl.BlockSpec((2, bb), lambda i: (0, i)),   # x^T  (batch tile on lanes)
                pl.BlockSpec((1, bb), lambda i: (0, i)),   # u^T
                pl.BlockSpec((H, 2), lambda i: (0, 0)),    # packed weights: VMEM-resident
                pl.BlockSpec((H, 1), lambda i: (0, 0)),
                pl.BlockSpec((H, 1), lambda i: (0, 0)),
                pl.BlockSpec((2, H), lambda i: (0, 0)),
                pl.BlockSpec((2, 1), lambda i: (0, 0)),
            ],
            out_specs=pl.BlockSpec((2, bb), lambda i: (0, i)),
        ),
        compiler_params=pltpu.CompilerParams(
            dimension_semantics=("parallel",),
        ),
    )(xT, uT, w1x, w1u, b1, w2, b2)

    # Back to (B, 2); column order is (dx_1, dx_2), matching torch.cat.
    return outT[:, :B].T


if __name__ == "__main__":
    key = jax.random.PRNGKey(0)
    n_feat = 64
    scale_dx = 0.5
    B = 256

    ks = jax.random.split(key, 10)
    in_x = jax.random.normal(ks[0], (B, 2), dtype=jnp.float32)
    in_u = jax.random.normal(ks[1], (B, 1), dtype=jnp.float32)

    # PyTorch-layout parameters (weight = (out, in)).  Use O(1) values rather
    # than the 1e-4 "init_small" init so the numerical check is meaningful.
    w11 = jax.random.normal(ks[2], (n_feat, 2), dtype=jnp.float32) * 0.5
    b11 = jax.random.normal(ks[3], (n_feat,), dtype=jnp.float32) * 0.1
    w21 = jax.random.normal(ks[4], (1, n_feat), dtype=jnp.float32) * 0.5
    b21 = jax.random.normal(ks[5], (1,), dtype=jnp.float32) * 0.1
    w12 = jax.random.normal(ks[6], (n_feat, 3), dtype=jnp.float32) * 0.5
    b12 = jax.random.normal(ks[7], (n_feat,), dtype=jnp.float32) * 0.1
    w22 = jax.random.normal(ks[8], (1, n_feat), dtype=jnp.float32) * 0.5
    b22 = jax.random.normal(ks[9], (1,), dtype=jnp.float32) * 0.1

    packed = pack_params(w11, b11, w21, b21, w12, b12, w22, b22, scale_dx=scale_dx)

    fwd = jax.jit(cascaded_tanks_forward)
    dx = jax.block_until_ready(fwd(in_x, in_u, *packed))

    # Plain-JAX reference of the PyTorch forward semantics.
    in1 = jnp.concatenate([in_x[:, 0:1], in_u], axis=-1)
    dx1 = jnp.maximum(in1 @ w11.T + b11, 0.0) @ w21.T + b21
    in2 = jnp.concatenate([in_x, in_u], axis=-1)
    dx2 = jnp.maximum(in2 @ w12.T + b12, 0.0) @ w22.T + b22
    ref = jnp.concatenate([dx1, dx2], axis=-1) * scale_dx

    np.testing.assert_allclose(np.asarray(dx), np.asarray(ref), rtol=1e-5, atol=1e-5)
    print("KERNEL_OK")
</pallas_src>

<mosaic_0001>
module attributes {stable_mosaic.version = 11 : i64} {
  func.func @_cascaded_mlp_kernel(%arg0: i32, %arg1: memref<2x256xf32, #tpu.memory_space<vmem>>, %arg2: memref<1x256xf32, #tpu.memory_space<vmem>>, %arg3: memref<128x2xf32, #tpu.memory_space<vmem>>, %arg4: memref<128x1xf32, #tpu.memory_space<vmem>>, %arg5: memref<128x1xf32, #tpu.memory_space<vmem>>, %arg6: memref<2x128xf32, #tpu.memory_space<vmem>>, %arg7: memref<2x1xf32, #tpu.memory_space<vmem>>, %arg8: memref<2x256xf32, #tpu.memory_space<vmem>>) attributes {dimension_semantics = [#tpu.dimension_semantics<parallel>], iteration_bounds = array<i64: 1>, scalar_prefetch = 0 : i64, scratch_operands = 0 : i64, tpu.core_type = #tpu.core_type<tc>, window_params = [{transform_indices = @transform_0, window_bounds = array<i64: 2, 256>}, {transform_indices = @transform_1, window_bounds = array<i64: 1, 256>}, {pipeline_mode = #tpu.pipeline_mode<synchronous>, transform_indices = @transform_2, window_bounds = array<i64: 128, 2>}, {pipeline_mode = #tpu.pipeline_mode<synchronous>, transform_indices = @transform_3, window_bounds = array<i64: 128, 1>}, {pipeline_mode = #tpu.pipeline_mode<synchronous>, transform_indices = @transform_4, window_bounds = array<i64: 128, 1>}, {pipeline_mode = #tpu.pipeline_mode<synchronous>, transform_indices = @transform_5, window_bounds = array<i64: 2, 128>}, {pipeline_mode = #tpu.pipeline_mode<synchronous>, transform_indices = @transform_6, window_bounds = array<i64: 2, 1>}, {transform_indices = @transform_7, window_bounds = array<i64: 2, 256>}]} {
    %c0 = arith.constant 0 : index
    %c0_0 = arith.constant 0 : index
    %0 = vector.load %arg3[%c0, %c0_0] : memref<128x2xf32, #tpu.memory_space<vmem>>, vector<128x2xf32>
    %c0_1 = arith.constant 0 : index
    %c0_2 = arith.constant 0 : index
    %1 = vector.load %arg1[%c0_1, %c0_2] : memref<2x256xf32, #tpu.memory_space<vmem>>, vector<2x256xf32>
    %cst = arith.constant dense<0.000000e+00> : vector<128x256xf32>
    %2 = tpu.matmul %0, %1, %cst {dimension_numbers = #tpu.dot_dimension_numbers<[1], [0], [0], [1], [0, 0, 1, 1], [], []>} : vector<128x2xf32>, vector<2x256xf32>, vector<128x256xf32> -> vector<128x256xf32>
    %c0_3 = arith.constant 0 : index
    %c0_4 = arith.constant 0 : index
    %3 = vector.load %arg4[%c0_3, %c0_4] : memref<128x1xf32, #tpu.memory_space<vmem>>, vector<128x1xf32>
    %c0_5 = arith.constant 0 : index
    %c0_6 = arith.constant 0 : index
    %4 = vector.load %arg2[%c0_5, %c0_6] : memref<1x256xf32, #tpu.memory_space<vmem>>, vector<1x256xf32>
    %cst_7 = arith.constant dense<0.000000e+00> : vector<128x256xf32>
    %5 = tpu.matmul %3, %4, %cst_7 {dimension_numbers = #tpu.dot_dimension_numbers<[1], [0], [0], [1], [0, 0, 1, 1], [], []>} : vector<128x1xf32>, vector<1x256xf32>, vector<128x256xf32> -> vector<128x256xf32>
    %6 = arith.addf %2, %5 : vector<128x256xf32>
    %c0_8 = arith.constant 0 : index
    %c0_9 = arith.constant 0 : index
    %7 = vector.load %arg5[%c0_8, %c0_9] : memref<128x1xf32, #tpu.memory_space<vmem>>, vector<128x1xf32>
    %8 = vector.broadcast %7 : vector<128x1xf32> to vector<128x256xf32>
    %9 = arith.addf %6, %8 : vector<128x256xf32>
    %cst_10 = arith.constant 0.000000e+00 : f32
    %10 = vector.broadcast %cst_10 : f32 to vector<128x256xf32>
    %11 = arith.maximumf %9, %10 : vector<128x256xf32>
    %c0_11 = arith.constant 0 : index
    %c0_12 = arith.constant 0 : index
    %12 = vector.load %arg6[%c0_11, %c0_12] : memref<2x128xf32, #tpu.memory_space<vmem>>, vector<2x128xf32>
    %cst_13 = arith.constant dense<0.000000e+00> : vector<2x256xf32>
    %13 = tpu.matmul %12, %11, %cst_13 {dimension_numbers = #tpu.dot_dimension_numbers<[1], [0], [0], [1], [0, 0, 1, 1], [], []>} : vector<2x128xf32>, vector<128x256xf32>, vector<2x256xf32> -> vector<2x256xf32>
    %c0_14 = arith.constant 0 : index
    %c0_15 = arith.constant 0 : index
    %14 = vector.load %arg7[%c0_14, %c0_15] : memref<2x1xf32, #tpu.memory_space<vmem>>, vector<2x1xf32>
    %15 = vector.broadcast %14 : vector<2x1xf32> to vector<2x256xf32>
    %16 = arith.addf %13, %15 : vector<2x256xf32>
    %c0_16 = arith.constant 0 : index
    %c0_17 = arith.constant 0 : index
    %17 = vector.load %arg8[%c0_16, %c0_17] : memref<2x256xf32, #tpu.memory_space<vmem>>, vector<2x256xf32>
    tpu.vector_store %arg8[%c0_16, %c0_17], %16 {strides = array<i32>} : memref<2x256xf32, #tpu.memory_space<vmem>>, vector<2x256xf32>,
    return
  }
  func.func @transform_0(%arg0: i32) -> (i32, i32) {
    %c0_i32 = arith.constant 0 : i32
    %c0_i32_0 = arith.constant 0 : i32
    return %c0_i32, %arg0 : i32, i32
  }
  func.func @transform_1(%arg0: i32) -> (i32, i32) {
    %c0_i32 = arith.constant 0 : i32
    %c0_i32_0 = arith.constant 0 : i32
    return %c0_i32, %arg0 : i32, i32
  }
  func.func @transform_2(%arg0: i32) -> (i32, i32) {
    %c0_i32 = arith.constant 0 : i32
    %c0_i32_0 = arith.constant 0 : i32
    %c0_i32_1 = arith.constant 0 : i32
    return %c0_i32, %c0_i32_0 : i32, i32
  }
  func.func @transform_3(%arg0: i32) -> (i32, i32) {
    %c0_i32 = arith.constant 0 : i32
    %c0_i32_0 = arith.constant 0 : i32
    %c0_i32_1 = arith.constant 0 : i32
    return %c0_i32, %c0_i32_0 : i32, i32
  }
  func.func @transform_4(%arg0: i32) -> (i32, i32) {
    %c0_i32 = arith.constant 0 : i32
    %c0_i32_0 = arith.constant 0 : i32
    %c0_i32_1 = arith.constant 0 : i32
    return %c0_i32, %c0_i32_0 : i32, i32
  }
  func.func @transform_5(%arg0: i32) -> (i32, i32) {
    %c0_i32 = arith.constant 0 : i32
    %c0_i32_0 = arith.constant 0 : i32
    %c0_i32_1 = arith.constant 0 : i32
    return %c0_i32, %c0_i32_0 : i32, i32
  }
  func.func @transform_6(%arg0: i32) -> (i32, i32) {
    %c0_i32 = arith.constant 0 : i32
    %c0_i32_0 = arith.constant 0 : i32
    %c0_i32_1 = arith.constant 0 : i32
    return %c0_i32, %c0_i32_0 : i32, i32
  }
  func.func @transform_7(%arg0: i32) -> (i32, i32) {
    %c0_i32 = arith.constant 0 : i32
    %c0_i32_0 = arith.constant 0 : i32
    return %c0_i32, %arg0 : i32, i32
  }
}

</mosaic_0001>

<llo_original>
// kernel: cascaded_tanks_forward.1
$region0: #{cascaded_tanks_forward.1}
  #allocation0 [shape = 'u32[]', space=smem, size = 0x4, offset = 0x4, fixed_abs, tag = 'smem constant byte address 0x4 - core index']
  #allocation1 [shape = 'u32[144,128]{1,0:T(1,128)}', space=vmem, size = 0x12000, scoped, tag = 'internal scratch']
  %s0 = inlined_call_operand.vmem [shape: f32[2,256], index: 0, kind: input, shape index: {}]
  %s1 = inlined_call_operand.vmem [shape: f32[1,256], index: 1, kind: input, shape index: {}]
  %s2 = inlined_call_operand.vmem [shape: f32[128,2], index: 2, kind: input, shape index: {}]
  %s3 = inlined_call_operand.vmem [shape: f32[128,1], index: 3, kind: input, shape index: {}]
  %s4 = inlined_call_operand.vmem [shape: f32[128,1], index: 4, kind: input, shape index: {}]
  %s5 = inlined_call_operand.vmem [shape: f32[2,128], index: 5, kind: input, shape index: {}]
  %s6 = inlined_call_operand.vmem [shape: f32[2,1], index: 6, kind: input, shape index: {}]
  %s7 = inlined_call_operand.hbm [shape: f32[2,256], index: 7, kind: output, shape index: {}]
  %s8 = sld [smem:[#allocation0]]
  $region38: #{cascaded_tanks_forward.1} parent=0
    _
  %s10 = ssub.s32 1, %s8
  %s11 = scalar_select 0, %s10, %s8
  $region1: #{cascaded_tanks_forward.1} parent=0
    #allocation2 [shape = 'u8[2048]{0}', space=vmem, size = 0x800, scoped, tag = 'output window, operand 0, single buffered']
    #allocation3 [shape = 's32[1]{0}', space=sflag, size = 0x4, scoped, tag = 'scoped memory for cascaded_tanks_forward.1']
    %12 = vsyncpa [#allocation3], 0
    // Predicated region
    $region2: #{cascaded_tanks_forward.1} parent=1 // pred_check
      _
    $region3: #{cascaded_tanks_forward.1} parent=1 // pred_check_branch
      %14 = sbr.rel (0) target = $region5
    $region4: #{cascaded_tanks_forward.1} parent=1 // pred_region
      _
    $region5: #{cascaded_tanks_forward.1} parent=1 // pred_fallthru
      _
    // Predicated region
    $region6: #{cascaded_tanks_forward.1} parent=1 // pred_check
      _
    $region7: #{cascaded_tanks_forward.1} parent=1 // pred_check_branch
      %16 = sbr.rel (0) target = $region9
    $region8: #{cascaded_tanks_forward.1} parent=1 // pred_region
      _
    $region9: #{cascaded_tanks_forward.1} parent=1 // pred_fallthru
      _
    // Predicated region
    $region10: #{cascaded_tanks_forward.1} parent=1 // pred_check
      _
    $region11: #{cascaded_tanks_forward.1} parent=1 // pred_check_branch
      %18 = sbr.rel (0) target = $region13
    $region12: #{cascaded_tanks_forward.1} parent=1 // pred_region
      _
    $region13: #{cascaded_tanks_forward.1} parent=1 // pred_fallthru
      _
    // Predicated region
    $region14: #{cascaded_tanks_forward.1} parent=1 // pred_check
      _
    $region15: #{cascaded_tanks_forward.1} parent=1 // pred_check_branch
      %20 = sbr.rel (0) target = $region17
    $region16: #{cascaded_tanks_forward.1} parent=1 // pred_region
      _
    $region17: #{cascaded_tanks_forward.1} parent=1 // pred_fallthru
      _
    // Predicated region
    $region18: #{cascaded_tanks_forward.1} parent=1 // pred_check
      _
    $region19: #{cascaded_tanks_forward.1} parent=1 // pred_check_branch
      %22 = sbr.rel (0) target = $region21
    $region20: #{cascaded_tanks_forward.1} parent=1 // pred_region
      _
    $region21: #{cascaded_tanks_forward.1} parent=1 // pred_fallthru
      _
    // Predicated region
    $region22: #{cascaded_tanks_forward.1} parent=1 // pred_check
      _
    $region23: #{cascaded_tanks_forward.1} parent=1 // pred_check_branch
      %24 = sbr.rel (0) target = $region25
    $region24: #{cascaded_tanks_forward.1} parent=1 // pred_region
      _
    $region25: #{cascaded_tanks_forward.1} parent=1 // pred_fallthru
      _
    // Predicated region
    $region26: #{cascaded_tanks_forward.1} parent=1 // pred_check
      _
    $region27: #{cascaded_tanks_forward.1} parent=1 // pred_check_branch
      %26 = sbr.rel (0) target = $region29
    $region28: #{cascaded_tanks_forward.1} parent=1 // pred_region
      _
    $region29: #{cascaded_tanks_forward.1} parent=1 // pred_fallthru
      _
    %v27 = vld [vmem:[%s2] sm:$0xff]
    %v28 = vld [vmem:[%s2 + $0x8] sm:$0xff]
    %v29 = vld [vmem:[%s2 + $0x10] sm:$0xff]
    %v30 = vld [vmem:[%s2 + $0x18] sm:$0xff]
    %v31 = vld [vmem:[%s2 + $0x20] sm:$0xff]
    %v32 = vld [vmem:[%s2 + $0x28] sm:$0xff]
    %v33 = vld [vmem:[%s2 + $0x30] sm:$0xff]
    %v34 = vld [vmem:[%s2 + $0x38] sm:$0xff]
    %v35 = vld [vmem:[%s2 + $0x40] sm:$0xff]
    %v36 = vld [vmem:[%s2 + $0x48] sm:$0xff]
    %v37 = vld [vmem:[%s2 + $0x50] sm:$0xff]
    %v38 = vld [vmem:[%s2 + $0x58] sm:$0xff]
    %v39 = vld [vmem:[%s2 + $0x60] sm:$0xff]
    %v40 = vld [vmem:[%s2 + $0x68] sm:$0xff]
    %v41 = vld [vmem:[%s2 + $0x70] sm:$0xff]
    %v42 = vld [vmem:[%s2 + $0x78] sm:$0xff]
    %v43 = vld [vmem:[%s0] sm:$0xf]
    %v44 = vld [vmem:[%s3] sm:$0xff]
    %v45 = vld [vmem:[%s3 + $0x8] sm:$0xff]
    %v46 = vld [vmem:[%s3 + $0x10] sm:$0xff]
    %v47 = vld [vmem:[%s3 + $0x18] sm:$0xff]
    %v48 = vld [vmem:[%s3 + $0x20] sm:$0xff]
    %v49 = vld [vmem:[%s3 + $0x28] sm:$0xff]
    %v50 = vld [vmem:[%s3 + $0x30] sm:$0xff]
    %v51 = vld [vmem:[%s3 + $0x38] sm:$0xff]
    %v52 = vld [vmem:[%s3 + $0x40] sm:$0xff]
    %v53 = vld [vmem:[%s3 + $0x48] sm:$0xff]
    %v54 = vld [vmem:[%s3 + $0x50] sm:$0xff]
    %v55 = vld [vmem:[%s3 + $0x58] sm:$0xff]
    %v56 = vld [vmem:[%s3 + $0x60] sm:$0xff]
    %v57 = vld [vmem:[%s3 + $0x68] sm:$0xff]
    %v58 = vld [vmem:[%s3 + $0x70] sm:$0xff]
    %v59 = vld [vmem:[%s3 + $0x78] sm:$0xff]
    %v60 = vld [vmem:[%s1] sm:$0x3]
    %v62 = vlaneseq
    %v63 = vshrl.u32 %v62, 7
    %v64 = vsub.s32 0, %v63
    %v65 = vrot.slane %v60, %v64
    %v66 = vlaneseq
    %v67 = vshrl.u32 %v66, 7
    %v68 = vsub.s32 1, %v67
    %v69 = vrot.slane %v60, %v68
    %vm70 = vcmask 7168
    %v72 = vsel %vm70, %v44, 0
    %v75 = vsel %vm70, %v45, 0
    %v78 = vsel %vm70, %v46, 0
    %v81 = vsel %vm70, %v47, 0
    %v84 = vsel %vm70, %v48, 0
    %v87 = vsel %vm70, %v49, 0
    %v90 = vsel %vm70, %v50, 0
    %v93 = vsel %vm70, %v51, 0
    %v96 = vsel %vm70, %v52, 0
    %v99 = vsel %vm70, %v53, 0
    %v102 = vsel %vm70, %v54, 0
    %v105 = vsel %vm70, %v55, 0
    %v108 = vsel %vm70, %v56, 0
    %v111 = vsel %vm70, %v57, 0
    %v114 = vsel %vm70, %v58, 0
    %v117 = vsel %vm70, %v59, 0
    %vm119 = vcmask 1040384
    %v120 = vsel %vm119, %v65, 0
    %v122 = vsel %vm119, %v69, 0
    %124 = vmatprep.subr.mxu0 %v122
    %125 = vmatpush1.msra.mxu0 %v120
    %126 = vmatprep.subr.mxu0 0.0
    %127 = vmatpush1.msra.mxu0 0.0
    %128 = vmatprep.subr.mxu0 0.0
    %129 = vmatpush1.msra.mxu0 0.0
    %130 = vmatprep.subr.mxu0 0.0
    %131 = vmatpush1.msra.mxu0 0.0
    %132 = vmatprep.subr.mxu0 0.0
    %133 = vmatpush1.msra.mxu0 0.0
    %134 = vmatprep.subr.mxu0 0.0
    %135 = vmatpush1.msra.mxu0 0.0
    %136 = vmatprep.subr.mxu0 0.0
    %137 = vmatpush1.msra.mxu0 0.0
    %138 = vmatprep.subr.mxu0 0.0
    %139 = vmatpush1.msra.mxu0 0.0
    %140 = vmatprep.subr.mxu0 0.0
    %141 = vmatpush1.msra.mxu0 0.0
    %142 = vmatprep.subr.mxu0 0.0
    %143 = vmatpush1.msra.mxu0 0.0
    %144 = vmatprep.subr.mxu0 0.0
    %145 = vmatpush1.msra.mxu0 0.0
    %146 = vmatprep.subr.mxu0 0.0
    %147 = vmatpush1.msra.mxu0 0.0
    %148 = vmatprep.subr.mxu0 0.0
    %149 = vmatpush1.msra.mxu0 0.0
    %150 = vmatprep.subr.mxu0 0.0
    %151 = vmatpush1.msra.mxu0 0.0
    %152 = vmatprep.subr.mxu0 0.0
    %153 = vmatpush1.msra.mxu0 0.0
    %154 = vmatprep.subr.mxu0 0.0
    %155 = vmatpush1.msra.mxu0 0.0
    %156 = vmatprep.subr.mxu0 0.0
    %157 = vmatpush1.msra.mxu0 0.0
    %158 = vmatprep.subr.mxu0 0.0
    %159 = vmatpush1.msra.mxu0 0.0
    %160 = vmatprep.subr.mxu0 0.0
    %161 = vmatpush1.msra.mxu0 0.0
    %162 = vmatprep.subr.mxu0 0.0
    %163 = vmatpush1.msra.mxu0 0.0
    %164 = vmatprep.subr.mxu0 0.0
    %165 = vmatpush1.msra.mxu0 0.0
    %166 = vmatprep.subr.mxu0 0.0
    %167 = vmatpush1.msra.mxu0 0.0
    %168 = vmatprep.subr.mxu0 0.0
    %169 = vmatpush1.msra.mxu0 0.0
    %170 = vmatprep.subr.mxu0 0.0
    %171 = vmatpush1.msra.mxu0 0.0
    %172 = vmatprep.subr.mxu0 0.0
    %173 = vmatpush1.msra.mxu0 0.0
    %174 = vmatprep.subr.mxu0 0.0
    %175 = vmatpush1.msra.mxu0 0.0
    %176 = vmatprep.subr.mxu0 0.0
    %177 = vmatpush1.msra.mxu0 0.0
    %178 = vmatprep.subr.mxu0 0.0
    %179 = vmatpush1.msra.mxu0 0.0
    %180 = vmatprep.subr.mxu0 0.0
    %181 = vmatpush1.msra.mxu0 0.0
    %182 = vmatprep.subr.mxu0 0.0
    %183 = vmatpush1.msra.mxu0 0.0
    %184 = vmatprep.subr.mxu0 0.0
    %185 = vmatpush1.msra.mxu0 0.0
    %186 = vmatprep.subr.mxu0 0.0
    %187 = vmatpush1.msra.mxu0 0.0
    %188 = vmatprep.mubr.f32.mxu0 0.0
    %189 = vmatmul.mubr.f32.gmra.mrb[0].mxu0 %v72
    %v190 = vpop.f32.mrb[0].mxu0
    %v191 = vadd.f32 0.0, %v190
    %v192 = vpop.f32.mrb[0].mxu0
    %v193 = vadd.f32 0.0, %v192
    %194 = vmatprep.mubr.f32.mxu0 0.0
    %195 = vmatmul.mubr.f32.gmra.mrb[0].mxu0 %v75
    %v196 = vpop.f32.mrb[0].mxu0
    %v197 = vadd.f32 0.0, %v196
    %v198 = vpop.f32.mrb[0].mxu0
    %v199 = vadd.f32 0.0, %v198
    %200 = vmatprep.mubr.f32.mxu0 0.0
    %201 = vmatmul.mubr.f32.gmra.mrb[0].mxu0 %v78
    %v202 = vpop.f32.mrb[0].mxu0
    %v203 = vadd.f32 0.0, %v202
    %v204 = vpop.f32.mrb[0].mxu0
    %v205 = vadd.f32 0.0, %v204
    %206 = vmatprep.mubr.f32.mxu0 0.0
    %207 = vmatmul.mubr.f32.gmra.mrb[0].mxu0 %v81
    %v208 = vpop.f32.mrb[0].mxu0
    %v209 = vadd.f32 0.0, %v208
    %v210 = vpop.f32.mrb[0].mxu0
    %v211 = vadd.f32 0.0, %v210
    %212 = vmatprep.mubr.f32.mxu0 0.0
    %213 = vmatmul.mubr.f32.gmra.mrb[0].mxu0 %v84
    %v214 = vpop.f32.mrb[0].mxu0
    %v215 = vadd.f32 0.0, %v214
    %v216 = vpop.f32.mrb[0].mxu0
    %v217 = vadd.f32 0.0, %v216
    %218 = vmatprep.mubr.f32.mxu0 0.0
    %219 = vmatmul.mubr.f32.gmra.mrb[0].mxu0 %v87
    %v220 = vpop.f32.mrb[0].mxu0
    %v221 = vadd.f32 0.0, %v220
    %v222 = vpop.f32.mrb[0].mxu0
    %v223 = vadd.f32 0.0, %v222
    %224 = vmatprep.mubr.f32.mxu0 0.0
    %225 = vmatmul.mubr.f32.gmra.mrb[0].mxu0 %v90
    %v226 = vpop.f32.mrb[0].mxu0
    %v227 = vadd.f32 0.0, %v226
    %v228 = vpop.f32.mrb[0].mxu0
    %v229 = vadd.f32 0.0, %v228
    %230 = vmatprep.mubr.f32.mxu0 0.0
    %231 = vmatmul.mubr.f32.gmra.mrb[0].mxu0 %v93
    %v232 = vpop.f32.mrb[0].mxu0
    %v233 = vadd.f32 0.0, %v232
    %v234 = vpop.f32.mrb[0].mxu0
    %v235 = vadd.f32 0.0, %v234
    %236 = vmatprep.mubr.f32.mxu0 0.0
    %237 = vmatmul.mubr.f32.gmra.mrb[0].mxu0 %v96
    %v238 = vpop.f32.mrb[0].mxu0
    %v239 = vadd.f32 0.0, %v238
    %v240 = vpop.f32.mrb[0].mxu0
    %v241 = vadd.f32 0.0, %v240
    %242 = vmatprep.mubr.f32.mxu0 0.0
    %243 = vmatmul.mubr.f32.gmra.mrb[0].mxu0 %v99
    %v244 = vpop.f32.mrb[0].mxu0
    %v245 = vadd.f32 0.0, %v244
    %v246 = vpop.f32.mrb[0].mxu0
    %v247 = vadd.f32 0.0, %v246
    %248 = vmatprep.mubr.f32.mxu0 0.0
    %249 = vmatmul.mubr.f32.gmra.mrb[0].mxu0 %v102
    %v250 = vpop.f32.mrb[0].mxu0
    %v251 = vadd.f32 0.0, %v250
    %v252 = vpop.f32.mrb[0].mxu0
    %v253 = vadd.f32 0.0, %v252
    %254 = vmatprep.mubr.f32.mxu0 0.0
    %255 = vmatmul.mubr.f32.gmra.mrb[0].mxu0 %v105
    %v256 = vpop.f32.mrb[0].mxu0
    %v257 = vadd.f32 0.0, %v256
    %v258 = vpop.f32.mrb[0].mxu0
    %v259 = vadd.f32 0.0, %v258
    %260 = vmatprep.mubr.f32.mxu0 0.0
    %261 = vmatmul.mubr.f32.gmra.mrb[0].mxu0 %v108
    %v262 = vpop.f32.mrb[0].mxu0
    %v263 = vadd.f32 0.0, %v262
    %v264 = vpop.f32.mrb[0].mxu0
    %v265 = vadd.f32 0.0, %v264
    %266 = vmatprep.mubr.f32.mxu0 0.0
    %267 = vmatmul.mubr.f32.gmra.mrb[0].mxu0 %v111
    %v268 = vpop.f32.mrb[0].mxu0
    %v269 = vadd.f32 0.0, %v268
    %v270 = vpop.f32.mrb[0].mxu0
    %v271 = vadd.f32 0.0, %v270
    %272 = vmatprep.mubr.f32.mxu0 0.0
    %273 = vmatmul.mubr.f32.gmra.mrb[0].mxu0 %v114
    %v274 = vpop.f32.mrb[0].mxu0
    %v275 = vadd.f32 0.0, %v274
    %v276 = vpop.f32.mrb[0].mxu0
    %v277 = vadd.f32 0.0, %v276
    %278 = vmatprep.mubr.f32.mxu0 0.0
    %279 = vmatmul.mubr.f32.gmra.mrb[0].mxu0 %v117
    %v280 = vpop.f32.mrb[0].mxu0
    %v281 = vadd.f32 0.0, %v280
    %v282 = vpop.f32.mrb[0].mxu0
    %v283 = vadd.f32 0.0, %v282
    %284 = vdwg.mxu0
    %v287 = vunpack.c.l.s4 1983009808
    %v288 = vunpack.c.0.s8 %v287
    %v289 = vlaneseq
    %v290 = vshrl.u32 %v289, 7
    %v291 = vsub.s32 %v288, %v290
    %v292 = vrot.slane %v43, %v291
    %v293 = vcombine.high %v292, %v292
    %vm294 = vcmask 15360
    %v296 = vsel %vm294, %v27, 0
    %v299 = vsel %vm294, %v28, 0
    %v302 = vsel %vm294, %v29, 0
    %v305 = vsel %vm294, %v30, 0
    %v308 = vsel %vm294, %v31, 0
    %v311 = vsel %vm294, %v32, 0
    %v314 = vsel %vm294, %v33, 0
    %v317 = vsel %vm294, %v34, 0
    %v320 = vsel %vm294, %v35, 0
    %v323 = vsel %vm294, %v36, 0
    %v326 = vsel %vm294, %v37, 0
    %v329 = vsel %vm294, %v38, 0
    %v332 = vsel %vm294, %v39, 0
    %v335 = vsel %vm294, %v40, 0
    %v338 = vsel %vm294, %v41, 0
    %v341 = vsel %vm294, %v42, 0
    %vm343 = vcmask 1041408
    %v344 = vsel %vm343, %v292, 0
    %v346 = vsel %vm343, %v293, 0
    %348 = vmatprep.subr.mxu0 %v346
    %349 = vmatpush1.msra.mxu0 %v344
    %350 = vmatprep.subr.mxu0 0.0
    %351 = vmatpush1.msra.mxu0 0.0
    %352 = vmatprep.subr.mxu0 0.0
    %353 = vmatpush1.msra.mxu0 0.0
    %354 = vmatprep.subr.mxu0 0.0
    %355 = vmatpush1.msra.mxu0 0.0
    %356 = vmatprep.subr.mxu0 0.0
    %357 = vmatpush1.msra.mxu0 0.0
    %358 = vmatprep.subr.mxu0 0.0
    %359 = vmatpush1.msra.mxu0 0.0
    %360 = vmatprep.subr.mxu0 0.0
    %361 = vmatpush1.msra.mxu0 0.0
    %362 = vmatprep.subr.mxu0 0.0
    %363 = vmatpush1.msra.mxu0 0.0
    %364 = vmatprep.subr.mxu0 0.0
    %365 = vmatpush1.msra.mxu0 0.0
    %366 = vmatprep.subr.mxu0 0.0
    %367 = vmatpush1.msra.mxu0 0.0
    %368 = vmatprep.subr.mxu0 0.0
    %369 = vmatpush1.msra.mxu0 0.0
    %370 = vmatprep.subr.mxu0 0.0
    %371 = vmatpush1.msra.mxu0 0.0
    %372 = vmatprep.subr.mxu0 0.0
    %373 = vmatpush1.msra.mxu0 0.0
    %374 = vmatprep.subr.mxu0 0.0
    %375 = vmatpush1.msra.mxu0 0.0
    %376 = vmatprep.subr.mxu0 0.0
    %377 = vmatpush1.msra.mxu0 0.0
    %378 = vmatprep.subr.mxu0 0.0
    %379 = vmatpush1.msra.mxu0 0.0
    %380 = vmatprep.subr.mxu0 0.0
    %381 = vmatpush1.msra.mxu0 0.0
    %382 = vmatprep.subr.mxu0 0.0
    %383 = vmatpush1.msra.mxu0 0.0
    %384 = vmatprep.subr.mxu0 0.0
    %385 = vmatpush1.msra.mxu0 0.0
    %386 = vmatprep.subr.mxu0 0.0
    %387 = vmatpush1.msra.mxu0 0.0
    %388 = vmatprep.subr.mxu0 0.0
    %389 = vmatpush1.msra.mxu0 0.0
    %390 = vmatprep.subr.mxu0 0.0
    %391 = vmatpush1.msra.mxu0 0.0
    %392 = vmatprep.subr.mxu0 0.0
    %393 = vmatpush1.msra.mxu0 0.0
    %394 = vmatprep.subr.mxu0 0.0
    %395 = vmatpush1.msra.mxu0 0.0
    %396 = vmatprep.subr.mxu0 0.0
    %397 = vmatpush1.msra.mxu0 0.0
    %398 = vmatprep.subr.mxu0 0.0
    %399 = vmatpush1.msra.mxu0 0.0
    %400 = vmatprep.subr.mxu0 0.0
    %401 = vmatpush1.msra.mxu0 0.0
    %402 = vmatprep.subr.mxu0 0.0
    %403 = vmatpush1.msra.mxu0 0.0
    %404 = vmatprep.subr.mxu0 0.0
    %405 = vmatpush1.msra.mxu0 0.0
    %406 = vmatprep.subr.mxu0 0.0
    %407 = vmatpush1.msra.mxu0 0.0
    %408 = vmatprep.subr.mxu0 0.0
    %409 = vmatpush1.msra.mxu0 0.0
    %410 = vmatprep.subr.mxu0 0.0
    %411 = vmatpush1.msra.mxu0 0.0
    %412 = vmatprep.mubr.f32.mxu0 0.0
    %413 = vmatmul.mubr.f32.gmra.mrb[0].mxu0 %v296
    %v414 = vpop.f32.mrb[0].mxu0
    %v415 = vadd.f32 %v191, %v414
    %v416 = vpop.f32.mrb[0].mxu0
    %v417 = vadd.f32 %v193, %v416
    %418 = vmatprep.mubr.f32.mxu0 0.0
    %419 = vmatmul.mubr.f32.gmra.mrb[0].mxu0 %v299
    %v420 = vpop.f32.mrb[0].mxu0
    %v421 = vadd.f32 %v197, %v420
    %v422 = vpop.f32.mrb[0].mxu0
    %v423 = vadd.f32 %v199, %v422
    %424 = vmatprep.mubr.f32.mxu0 0.0
    %425 = vmatmul.mubr.f32.gmra.mrb[0].mxu0 %v302
    %v426 = vpop.f32.mrb[0].mxu0
    %v427 = vadd.f32 %v203, %v426
    %v428 = vpop.f32.mrb[0].mxu0
    %v429 = vadd.f32 %v205, %v428
    %430 = vmatprep.mubr.f32.mxu0 0.0
    %431 = vmatmul.mubr.f32.gmra.mrb[0].mxu0 %v305
    %v432 = vpop.f32.mrb[0].mxu0
    %v433 = vadd.f32 %v209, %v432
    %v434 = vpop.f32.mrb[0].mxu0
    %v435 = vadd.f32 %v211, %v434
    %436 = vmatprep.mubr.f32.mxu0 0.0
    %437 = vmatmul.mubr.f32.gmra.mrb[0].mxu0 %v308
    %v438 = vpop.f32.mrb[0].mxu0
    %v439 = vadd.f32 %v215, %v438
    %v440 = vpop.f32.mrb[0].mxu0
    %v441 = vadd.f32 %v217, %v440
    %442 = vmatprep.mubr.f32.mxu0 0.0
    %443 = vmatmul.mubr.f32.gmra.mrb[0].mxu0 %v311
    %v444 = vpop.f32.mrb[0].mxu0
    %v445 = vadd.f32 %v221, %v444
    %v446 = vpop.f32.mrb[0].mxu0
    %v447 = vadd.f32 %v223, %v446
    %448 = vmatprep.mubr.f32.mxu0 0.0
    %449 = vmatmul.mubr.f32.gmra.mrb[0].mxu0 %v314
    %v450 = vpop.f32.mrb[0].mxu0
    %v451 = vadd.f32 %v227, %v450
    %v452 = vpop.f32.mrb[0].mxu0
    %v453 = vadd.f32 %v229, %v452
    %454 = vmatprep.mubr.f32.mxu0 0.0
    %455 = vmatmul.mubr.f32.gmra.mrb[0].mxu0 %v317
    %v456 = vpop.f32.mrb[0].mxu0
    %v457 = vadd.f32 %v233, %v456
    %v458 = vpop.f32.mrb[0].mxu0
    %v459 = vadd.f32 %v235, %v458
    %460 = vmatprep.mubr.f32.mxu0 0.0
    %461 = vmatmul.mubr.f32.gmra.mrb[0].mxu0 %v320
    %v462 = vpop.f32.mrb[0].mxu0
    %v463 = vadd.f32 %v239, %v462
    %v464 = vpop.f32.mrb[0].mxu0
    %v465 = vadd.f32 %v241, %v464
    %466 = vmatprep.mubr.f32.mxu0 0.0
    %467 = vmatmul.mubr.f32.gmra.mrb[0].mxu0 %v323
    %v468 = vpop.f32.mrb[0].mxu0
    %v469 = vadd.f32 %v245, %v468
    %v470 = vpop.f32.mrb[0].mxu0
    %v471 = vadd.f32 %v247, %v470
    %472 = vmatprep.mubr.f32.mxu0 0.0
    %473 = vmatmul.mubr.f32.gmra.mrb[0].mxu0 %v326
    %v474 = vpop.f32.mrb[0].mxu0
    %v475 = vadd.f32 %v251, %v474
    %v476 = vpop.f32.mrb[0].mxu0
    %v477 = vadd.f32 %v253, %v476
    %478 = vmatprep.mubr.f32.mxu0 0.0
    %479 = vmatmul.mubr.f32.gmra.mrb[0].mxu0 %v329
    %v480 = vpop.f32.mrb[0].mxu0
    %v481 = vadd.f32 %v257, %v480
    %v482 = vpop.f32.mrb[0].mxu0
    %v483 = vadd.f32 %v259, %v482
    %484 = vmatprep.mubr.f32.mxu0 0.0
    %485 = vmatmul.mubr.f32.gmra.mrb[0].mxu0 %v332
    %v486 = vpop.f32.mrb[0].mxu0
    %v487 = vadd.f32 %v263, %v486
    %v488 = vpop.f32.mrb[0].mxu0
    %v489 = vadd.f32 %v265, %v488
    %490 = vmatprep.mubr.f32.mxu0 0.0
    %491 = vmatmul.mubr.f32.gmra.mrb[0].mxu0 %v335
    %v492 = vpop.f32.mrb[0].mxu0
    %v493 = vadd.f32 %v269, %v492
    %v494 = vpop.f32.mrb[0].mxu0
    %v495 = vadd.f32 %v271, %v494
    %496 = vmatprep.mubr.f32.mxu0 0.0
    %497 = vmatmul.mubr.f32.gmra.mrb[0].mxu0 %v338
    %v498 = vpop.f32.mrb[0].mxu0
    %v499 = vadd.f32 %v275, %v498
    %v500 = vpop.f32.mrb[0].mxu0
    %v501 = vadd.f32 %v277, %v500
    %502 = vmatprep.mubr.f32.mxu0 0.0
    %503 = vmatmul.mubr.f32.gmra.mrb[0].mxu0 %v341
    %v504 = vpop.f32.mrb[0].mxu0
    %v505 = vadd.f32 %v281, %v504
    %v506 = vpop.f32.mrb[0].mxu0
    %v507 = vadd.f32 %v283, %v506
    %508 = vdwg.mxu0
    %v509 = vld [vmem:[%s4] sm:$0xff]
    %v510 = vld [vmem:[%s4 + $0x8] sm:$0xff]
    %v511 = vld [vmem:[%s4 + $0x10] sm:$0xff]
    %v512 = vld [vmem:[%s4 + $0x18] sm:$0xff]
    %v513 = vld [vmem:[%s4 + $0x20] sm:$0xff]
    %v514 = vld [vmem:[%s4 + $0x28] sm:$0xff]
    %v515 = vld [vmem:[%s4 + $0x30] sm:$0xff]
    %v516 = vld [vmem:[%s4 + $0x38] sm:$0xff]
    %v517 = vld [vmem:[%s4 + $0x40] sm:$0xff]
    %v518 = vld [vmem:[%s4 + $0x48] sm:$0xff]
    %v519 = vld [vmem:[%s4 + $0x50] sm:$0xff]
    %v520 = vld [vmem:[%s4 + $0x58] sm:$0xff]
    %v521 = vld [vmem:[%s4 + $0x60] sm:$0xff]
    %v522 = vld [vmem:[%s4 + $0x68] sm:$0xff]
    %v523 = vld [vmem:[%s4 + $0x70] sm:$0xff]
    %v524 = vld [vmem:[%s4 + $0x78] sm:$0xff]
    %526 = vset.pattern.permute.xlu0 0
    %527 = vperm.xlu0 %526, %v509
    %v528 = vpop.permute.xlu0 %527
    %531 = vset.pattern.permute.xlu0 0
    %532 = vperm.xlu0 %531, %v510
    %v533 = vpop.permute.xlu0 %532
    %536 = vset.pattern.permute.xlu0 0
    %537 = vperm.xlu0 %536, %v511
    %v538 = vpop.permute.xlu0 %537
    %541 = vset.pattern.permute.xlu0 0
    %542 = vperm.xlu0 %541, %v512
    %v543 = vpop.permute.xlu0 %542
    %546 = vset.pattern.permute.xlu0 0
    %547 = vperm.xlu0 %546, %v513
    %v548 = vpop.permute.xlu0 %547
    %551 = vset.pattern.permute.xlu0 0
    %552 = vperm.xlu0 %551, %v514
    %v553 = vpop.permute.xlu0 %552
    %556 = vset.pattern.permute.xlu0 0
    %557 = vperm.xlu0 %556, %v515
    %v558 = vpop.permute.xlu0 %557
    %561 = vset.pattern.permute.xlu0 0
    %562 = vperm.xlu0 %561, %v516
    %v563 = vpop.permute.xlu0 %562
    %566 = vset.pattern.permute.xlu0 0
    %567 = vperm.xlu0 %566, %v517
    %v568 = vpop.permute.xlu0 %567
    %571 = vset.pattern.permute.xlu0 0
    %572 = vperm.xlu0 %571, %v518
    %v573 = vpop.permute.xlu0 %572
    %576 = vset.pattern.permute.xlu0 0
    %577 = vperm.xlu0 %576, %v519
    %v578 = vpop.permute.xlu0 %577
    %581 = vset.pattern.permute.xlu0 0
    %582 = vperm.xlu0 %581, %v520
    %v583 = vpop.permute.xlu0 %582
    %586 = vset.pattern.permute.xlu0 0
    %587 = vperm.xlu0 %586, %v521
    %v588 = vpop.permute.xlu0 %587
    %591 = vset.pattern.permute.xlu0 0
    %592 = vperm.xlu0 %591, %v522
    %v593 = vpop.permute.xlu0 %592
    %596 = vset.pattern.permute.xlu0 0
    %597 = vperm.xlu0 %596, %v523
    %v598 = vpop.permute.xlu0 %597
    %601 = vset.pattern.permute.xlu0 0
    %602 = vperm.xlu0 %601, %v524
    %v603 = vpop.permute.xlu0 %602
    %v605 = vadd.f32 %v415, %v528
    %v606 = vadd.f32 %v417, %v528
    %v607 = vadd.f32 %v421, %v533
    %v608 = vadd.f32 %v423, %v533
    %v609 = vadd.f32 %v427, %v538
    %v610 = vadd.f32 %v429, %v538
    %v611 = vadd.f32 %v433, %v543
    %v612 = vadd.f32 %v435, %v543
    %v613 = vadd.f32 %v439, %v548
    %v614 = vadd.f32 %v441, %v548
    %v615 = vadd.f32 %v445, %v553
    %v616 = vadd.f32 %v447, %v553
    %v617 = vadd.f32 %v451, %v558
    %v618 = vadd.f32 %v453, %v558
    %v619 = vadd.f32 %v457, %v563
    %v620 = vadd.f32 %v459, %v563
    %v621 = vadd.f32 %v463, %v568
    %v622 = vadd.f32 %v465, %v568
    %v623 = vadd.f32 %v469, %v573
    %v624 = vadd.f32 %v471, %v573
    %v625 = vadd.f32 %v475, %v578
    %v626 = vadd.f32 %v477, %v578
    %v627 = vadd.f32 %v481, %v583
    %v628 = vadd.f32 %v483, %v583
    %v629 = vadd.f32 %v487, %v588
    %v630 = vadd.f32 %v489, %v588
    %v631 = vadd.f32 %v493, %v593
    %v632 = vadd.f32 %v495, %v593
    %v633 = vadd.f32 %v499, %v598
    %v634 = vadd.f32 %v501, %v598
    %v635 = vadd.f32 %v505, %v603
    %v636 = vadd.f32 %v507, %v603
    %v637 = vmax.f32 %v605, 0.0
    %v638 = vmax.f32 %v606, 0.0
    %v639 = vmax.f32 %v607, 0.0
    %v640 = vmax.f32 %v608, 0.0
    %v641 = vmax.f32 %v609, 0.0
    %v642 = vmax.f32 %v610, 0.0
    %v643 = vmax.f32 %v611, 0.0
    %v644 = vmax.f32 %v612, 0.0
    %v645 = vmax.f32 %v613, 0.0
    %v646 = vmax.f32 %v614, 0.0
    %v647 = vmax.f32 %v615, 0.0
    %v648 = vmax.f32 %v616, 0.0
    %v649 = vmax.f32 %v617, 0.0
    %v650 = vmax.f32 %v618, 0.0
    %v651 = vmax.f32 %v619, 0.0
    %v652 = vmax.f32 %v620, 0.0
    %v653 = vmax.f32 %v621, 0.0
    %v654 = vmax.f32 %v622, 0.0
    %v655 = vmax.f32 %v623, 0.0
    %v656 = vmax.f32 %v624, 0.0
    %v657 = vmax.f32 %v625, 0.0
    %v658 = vmax.f32 %v626, 0.0
    %v659 = vmax.f32 %v627, 0.0
    %v660 = vmax.f32 %v628, 0.0
    %v661 = vmax.f32 %v629, 0.0
    %v662 = vmax.f32 %v630, 0.0
    %v663 = vmax.f32 %v631, 0.0
    %v664 = vmax.f32 %v632, 0.0
    %v665 = vmax.f32 %v633, 0.0
    %v666 = vmax.f32 %v634, 0.0
    %v667 = vmax.f32 %v635, 0.0
    %v668 = vmax.f32 %v636, 0.0
    %v669 = vld [vmem:[%s5] sm:$0x3]
    %v670 = vld [vmem:[%s6] sm:$0x3]
    %672 = vset.pattern.permute.xlu0 0
    %673 = vperm.xlu0 %672, %v670
    %v674 = vpop.permute.xlu0 %673
    %676 = vmatprep.subr.mxu0 %v638
    %677 = vmatpush1.msra.mxu0 %v637
    %678 = vmatprep.subr.mxu0 %v640
    %679 = vmatpush1.msra.mxu0 %v639
    %680 = vmatprep.subr.mxu0 %v642
    %681 = vmatpush1.msra.mxu0 %v641
    %682 = vmatprep.subr.mxu0 %v644
    %683 = vmatpush1.msra.mxu0 %v643
    %684 = vmatprep.subr.mxu0 %v646
    %685 = vmatpush1.msra.mxu0 %v645
    %686 = vmatprep.subr.mxu0 %v648
    %687 = vmatpush1.msra.mxu0 %v647
    %688 = vmatprep.subr.mxu0 %v650
    %689 = vmatpush1.msra.mxu0 %v649
    %690 = vmatprep.subr.mxu0 %v652
    %691 = vmatpush1.msra.mxu0 %v651
    %692 = vmatprep.subr.mxu0 %v654
    %693 = vmatpush1.msra.mxu0 %v653
    %694 = vmatprep.subr.mxu0 %v656
    %695 = vmatpush1.msra.mxu0 %v655
    %696 = vmatprep.subr.mxu0 %v658
    %697 = vmatpush1.msra.mxu0 %v657
    %698 = vmatprep.subr.mxu0 %v660
    %699 = vmatpush1.msra.mxu0 %v659
    %700 = vmatprep.subr.mxu0 %v662
    %701 = vmatpush1.msra.mxu0 %v661
    %702 = vmatprep.subr.mxu0 %v664
    %703 = vmatpush1.msra.mxu0 %v663
    %704 = vmatprep.subr.mxu0 %v666
    %705 = vmatpush1.msra.mxu0 %v665
    %706 = vmatprep.subr.mxu0 %v668
    %707 = vmatpush1.msra.mxu0 %v667
    %708 = vmatprep.subr.mxu0 0.0
    %709 = vmatpush1.msra.mxu0 0.0
    %710 = vmatprep.subr.mxu0 0.0
    %711 = vmatpush1.msra.mxu0 0.0
    %712 = vmatprep.subr.mxu0 0.0
    %713 = vmatpush1.msra.mxu0 0.0
    %714 = vmatprep.subr.mxu0 0.0
    %715 = vmatpush1.msra.mxu0 0.0
    %716 = vmatprep.subr.mxu0 0.0
    %717 = vmatpush1.msra.mxu0 0.0
    %718 = vmatprep.subr.mxu0 0.0
    %719 = vmatpush1.msra.mxu0 0.0
    %720 = vmatprep.subr.mxu0 0.0
    %721 = vmatpush1.msra.mxu0 0.0
    %722 = vmatprep.subr.mxu0 0.0
    %723 = vmatpush1.msra.mxu0 0.0
    %724 = vmatprep.subr.mxu0 0.0
    %725 = vmatpush1.msra.mxu0 0.0
    %726 = vmatprep.subr.mxu0 0.0
    %727 = vmatpush1.msra.mxu0 0.0
    %728 = vmatprep.subr.mxu0 0.0
    %729 = vmatpush1.msra.mxu0 0.0
    %730 = vmatprep.subr.mxu0 0.0
    %731 = vmatpush1.msra.mxu0 0.0
    %732 = vmatprep.subr.mxu0 0.0
    %733 = vmatpush1.msra.mxu0 0.0
    %734 = vmatprep.subr.mxu0 0.0
    %735 = vmatpush1.msra.mxu0 0.0
    %736 = vmatprep.subr.mxu0 0.0
    %737 = vmatpush1.msra.mxu0 0.0
    %738 = vmatprep.subr.mxu0 0.0
    %739 = vmatpush1.msra.mxu0 0.0
    %740 = vmatprep.mubr.f32.mxu0 0.0
    %741 = vmatmul.mubr.f32.gmra.mrb[0].mxu0 %v669
    %v742 = vpop.f32.mrb[0].mxu0
    %v743 = vadd.f32 %v674, %v742
    %v744 = vpop.f32.mrb[0].mxu0
    %v745 = vadd.f32 %v674, %v744
    %746 = vdwg.mxu0
    %v749 = vcombine.low %v743, %v745
    %v751 = vunpack.c.l.s4 1983009808
    %v752 = vunpack.c.0.s8 %v751
    %v753 = vlaneseq
    %v754 = vshrl.u32 %v753, 7
    %v755 = vsub.s32 %v752, %v754
    %v756 = vrot.slane %v749, %v755
    %758 = vst [vmem:[#allocation2] sm:$0xf] %v756
    // Predicated region
    $region30: #{cascaded_tanks_forward.1} parent=1 // pred_check
      _
    $region31: #{cascaded_tanks_forward.1} parent=1 // pred_check_branch
      %760 = sbr.rel (0) target = $region33
    $region32: #{cascaded_tanks_forward.1} parent=1 // pred_region
      %s762 = ssub.s32 64, 64
      %763 = vsyncadd [#allocation3], %s762
      %s765 = sshll.u32 [#allocation2], 4
      %s766 = int_to_ptr.vmem [resolvable:$true] %s765
      %768 = dma.vmem_to_hbm [thread:$0]  %s766, 64, %s7, [#allocation3]
    $region33: #{cascaded_tanks_forward.1} parent=1 // pred_fallthru
      _
    // Predicated region
    $region34: #{cascaded_tanks_forward.1} parent=1 // pred_check
      _
    $region35: #{cascaded_tanks_forward.1} parent=1 // pred_check_branch
      %770 = sbr.rel (0) target = $region37
    $region36: #{cascaded_tanks_forward.1} parent=1 // pred_region
      %771 = dma.done [#allocation3], 64
    $region37: #{cascaded_tanks_forward.1} parent=1 // pred_fallthru
      _
    %772 = vsyncpa [#allocation3], 1

</llo_original>
